<compile_context>
chip_gen: v7x
topology: tpu7x:2x2x1
jax: 0.10.0
libtpu: 0.0.40
codegen_flags: <defaults>
</compile_context>

<pallas_src>
import functools
import math

import jax
import jax.numpy as jnp
from jax import lax
from jax.experimental import pallas as pl
from jax.experimental.pallas import tpu as pltpu

MASK_VALUE = -1e30                    # finite "minus infinity" for masked scores
VMEM_LIMIT_BYTES = 48 * 1024 * 1024   # safe on v7x (64 MiB physical); tiny footprint anyway


def _pick_tile(n):
    """Largest candidate q tile (<=256, multiple of 8) dividing n."""
    for c in (256, 128, 64, 32, 16, 8):
        if c <= n and n % c == 0:
            return c
    return n  # block equal to the full dim is always legal


# ---------------------------------------------------------------------------
# Fused kernel: QKV projection (once per batch) + full-row softmax attention.
# ---------------------------------------------------------------------------
def _fused_head_kernel(x_ref, w_ref, o_ref, q_sc, k_sc, v_sc,
                       *, tq, head_size, causal, t_total):
    qi = pl.program_id(1)

    @pl.when(qi == 0)
    def _project():
        # One fused matmul per batch: (T, C) @ (C, 3*hs) -> (T, 3*hs).
        # Softmax scale is already folded into the Q columns of w_ref.
        y = jnp.dot(x_ref[0], w_ref[...], preferred_element_type=jnp.float32)
        q_sc[...] = y[:, :head_size].astype(q_sc.dtype)
        k_sc[...] = y[:, head_size:2 * head_size].astype(k_sc.dtype)
        v_sc[...] = y[:, 2 * head_size:].astype(v_sc.dtype)

    q_start = pl.multiple_of(qi * tq, tq)
    q = q_sc[pl.ds(q_start, tq), :]               # (tq, hs) bf16, pre-scaled

    # scores = q @ K^T (contract head dim; no explicit transpose op).
    s = lax.dot_general(q, k_sc[...], (((1,), (1,)), ((), ())),
                        preferred_element_type=jnp.float32)   # (tq, T) f32

    if causal:
        row = q_start + lax.broadcasted_iota(jnp.int32, (tq, t_total), 0)
        col = lax.broadcasted_iota(jnp.int32, (tq, t_total), 1)
        s = jnp.where(row >= col, s, MASK_VALUE)
        # Every row has at least one unmasked column (the diagonal), so the
        # softmax denominator below is never zero.

    m = jnp.max(s, axis=-1, keepdims=True)        # (tq, 1) f32
    p = jnp.exp(s - m)                            # (tq, T) f32
    l = jnp.sum(p, axis=-1, keepdims=True)        # (tq, 1) f32
    acc = jnp.dot(p.astype(v_sc.dtype), v_sc[...],
                  preferred_element_type=jnp.float32)          # (tq, hs) f32
    inv_l = pl.reciprocal(l, approx=True)         # EUP, not a VPU divide
    o_ref[0] = (acc * inv_l).astype(o_ref.dtype)


# ---------------------------------------------------------------------------
# Wrapper: matches PyTorch Head.forward (eval mode).
# ---------------------------------------------------------------------------
def head_forward(x, wq, wk, wv, *, head_size, mask=True, block_q=None):
    """x: (B, T, C) ; wq/wk/wv: (head_size, C) PyTorch (out, in) layout.

    Returns (B, T, head_size)."""
    B, T, C = x.shape
    assert wq.shape == (head_size, C)
    assert wk.shape == (head_size, C)
    assert wv.shape == (head_size, C)

    scale = head_size ** (-0.5)
    x_bf = x.astype(jnp.bfloat16)
    # Pre-transpose to (in, out), fuse [Q | K | V] along the out axis, and
    # fold the softmax scale into the Q columns — all once on the host.
    w_qkv = jnp.concatenate([wq.T * scale, wk.T, wv.T],
                            axis=1).astype(jnp.bfloat16)       # (C, 3*hs)

    tq = block_q if block_q is not None else _pick_tile(T)
    assert T % tq == 0, "block_q must divide T"

    kernel = functools.partial(_fused_head_kernel, tq=tq, head_size=head_size,
                               causal=mask, t_total=T)

    out = pl.pallas_call(
        kernel,
        out_shape=jax.ShapeDtypeStruct((B, T, head_size), x.dtype),
        grid_spec=pltpu.PrefetchScalarGridSpec(
            num_scalar_prefetch=0,
            grid=(B, T // tq),
            in_specs=[
                # Full-T x block: same block index for every qi of a batch,
                # so it is DMA'd once per batch and stays resident.
                pl.BlockSpec((1, T, C), lambda b, qi: (b, 0, 0)),
                # Fused projection weight: constant block index -> resident.
                pl.BlockSpec((C, 3 * head_size), lambda b, qi: (0, 0)),
            ],
            out_specs=pl.BlockSpec((1, tq, head_size),
                                   lambda b, qi: (b, qi, 0)),
            scratch_shapes=[
                pltpu.VMEM((T, head_size), jnp.bfloat16),   # Q (pre-scaled)
                pltpu.VMEM((T, head_size), jnp.bfloat16),   # K
                pltpu.VMEM((T, head_size), jnp.bfloat16),   # V
            ],
        ),
        compiler_params=pltpu.CompilerParams(
            dimension_semantics=("parallel", "arbitrary"),
            vmem_limit_bytes=VMEM_LIMIT_BYTES),
    )(x_bf, w_qkv)
    return out


# ---------------------------------------------------------------------------
# Pure-JAX reference (PyTorch Head in eval mode), high-precision matmuls.
# ---------------------------------------------------------------------------
def _reference(x, wq, wk, wv, *, head_size, mask=True):
    with jax.default_matmul_precision("highest"):
        q = x @ wq.T
        k = x @ wk.T
        v = x @ wv.T
        wei = (q @ jnp.swapaxes(k, -2, -1)) * head_size ** (-0.5)
        if mask:
            T = x.shape[1]
            tril = jnp.tril(jnp.ones((T, T), dtype=bool))
            wei = jnp.where(tril, wei, -jnp.inf)
        wei = jax.nn.softmax(wei, axis=-1)
        return wei @ v


if __name__ == "__main__":
    # Small shapes consistent with the module (n_embd analogue C, head_size).
    B, T, C = 2, 128, 64
    head_size = 16

    key = jax.random.PRNGKey(0)
    kx, kq, kk, kv_ = jax.random.split(key, 4)
    bound = 1.0 / math.sqrt(C)
    x = jax.random.normal(kx, (B, T, C), dtype=jnp.float32)
    wq = jax.random.uniform(kq, (head_size, C), jnp.float32, -bound, bound)
    wk = jax.random.uniform(kk, (head_size, C), jnp.float32, -bound, bound)
    wv = jax.random.uniform(kv_, (head_size, C), jnp.float32, -bound, bound)

    # Multi-q-tile path (2 q tiles; exercises qi==0 projection into scratch
    # and its reuse at qi==1), causal.
    out = head_forward(x, wq, wk, wv, head_size=head_size, mask=True,
                       block_q=64)
    out = jax.block_until_ready(out)
    ref = _reference(x, wq, wk, wv, head_size=head_size, mask=True)
    assert out.shape == (B, T, head_size)
    err = float(jnp.max(jnp.abs(out - ref)))
    assert err < 3e-2, f"causal mismatch vs reference: max err {err}"

    # Default tile choice, causal.
    out_d = jax.block_until_ready(
        head_forward(x, wq, wk, wv, head_size=head_size, mask=True))
    err_d = float(jnp.max(jnp.abs(out_d - ref)))
    assert err_d < 3e-2, f"default-tile mismatch vs reference: max err {err_d}"

    # Degenerate tiny-T single-tile path, causal.
    T2 = 8
    x2 = jax.random.normal(kx, (B, T2, C), dtype=jnp.float32)
    out2 = jax.block_until_ready(
        head_forward(x2, wq, wk, wv, head_size=head_size, mask=True))
    ref2 = _reference(x2, wq, wk, wv, head_size=head_size, mask=True)
    err2 = float(jnp.max(jnp.abs(out2 - ref2)))
    assert err2 < 3e-2, f"tiny-T mismatch vs reference: max err {err2}"

    # mask=False path (module's mask flag).
    out3 = jax.block_until_ready(
        head_forward(x2, wq, wk, wv, head_size=head_size, mask=False))
    ref3 = _reference(x2, wq, wk, wv, head_size=head_size, mask=False)
    err3 = float(jnp.max(jnp.abs(out3 - ref3)))
    assert err3 < 3e-2, f"no-mask mismatch vs reference: max err {err3}"

    print("KERNEL_OK")
</pallas_src>

<mosaic_0001>
module attributes {stable_mosaic.version = 11 : i64} {
  func.func @_fused_head_kernel(%arg0: i32, %arg1: i32, %arg2: memref<1x128x64xbf16, #tpu.memory_space<vmem>>, %arg3: memref<64x48xbf16, #tpu.memory_space<vmem>>, %arg4: memref<1x64x16xf32, #tpu.memory_space<vmem>>, %arg5: memref<128x16xbf16, #tpu.memory_space<vmem>>, %arg6: memref<128x16xbf16, #tpu.memory_space<vmem>>, %arg7: memref<128x16xbf16, #tpu.memory_space<vmem>>) attributes {dimension_semantics = [#tpu.dimension_semantics<parallel>, #tpu.dimension_semantics<arbitrary>], iteration_bounds = array<i64: 2, 2>, scalar_prefetch = 0 : i64, scratch_operands = 3 : i64, tpu.core_type = #tpu.core_type<tc>, window_params = [{transform_indices = @transform_0, window_bounds = array<i64: 1, 128, 64>}, {pipeline_mode = #tpu.pipeline_mode<synchronous>, transform_indices = @transform_1, window_bounds = array<i64: 64, 48>}, {transform_indices = @transform_2, window_bounds = array<i64: 1, 64, 16>}]} {
    %c0_i32 = arith.constant 0 : i32
    %0 = arith.cmpi eq, %arg1, %c0_i32 : i32
    %1 = arith.extui %0 : i1 to i32
    %c0_i32_0 = arith.constant 0 : i32
    %2 = arith.cmpi ne, %1, %c0_i32_0 : i32
    scf.if %2 {
      %c0_12 = arith.constant 0 : index
      %c0_13 = arith.constant 0 : index
      %c0_14 = arith.constant 0 : index
      %32 = vector.load %arg2[%c0_12, %c0_13, %c0_14] : memref<1x128x64xbf16, #tpu.memory_space<vmem>>, vector<1x128x64xbf16>
      %33 = vector.shape_cast %32 : vector<1x128x64xbf16> to vector<128x64xbf16>
      %c0_15 = arith.constant 0 : index
      %c0_16 = arith.constant 0 : index
      %34 = vector.load %arg3[%c0_15, %c0_16] : memref<64x48xbf16, #tpu.memory_space<vmem>>, vector<64x48xbf16>
      %cst_17 = arith.constant dense<0.000000e+00> : vector<128x48xf32>
      %35 = tpu.matmul %33, %34, %cst_17 {dimension_numbers = #tpu.dot_dimension_numbers<[1], [0], [0], [1], [0, 0, 1, 1], [], []>} : vector<128x64xbf16>, vector<64x48xbf16>, vector<128x48xf32> -> vector<128x48xf32>
      %36 = vector.extract_strided_slice %35 {offsets = [0, 0], sizes = [128, 16], strides = [1, 1]} : vector<128x48xf32> to vector<128x16xf32>
      %37 = arith.truncf %36 : vector<128x16xf32> to vector<128x16xbf16>
      %c0_18 = arith.constant 0 : index
      %c0_19 = arith.constant 0 : index
      %38 = vector.load %arg5[%c0_18, %c0_19] : memref<128x16xbf16, #tpu.memory_space<vmem>>, vector<128x16xbf16>
      tpu.vector_store %arg5[%c0_18, %c0_19], %37 {strides = array<i32>} : memref<128x16xbf16, #tpu.memory_space<vmem>>, vector<128x16xbf16>,
      %39 = vector.extract_strided_slice %35 {offsets = [0, 16], sizes = [128, 16], strides = [1, 1]} : vector<128x48xf32> to vector<128x16xf32>
      %40 = arith.truncf %39 : vector<128x16xf32> to vector<128x16xbf16>
      %c0_20 = arith.constant 0 : index
      %c0_21 = arith.constant 0 : index
      %41 = vector.load %arg6[%c0_20, %c0_21] : memref<128x16xbf16, #tpu.memory_space<vmem>>, vector<128x16xbf16>
      tpu.vector_store %arg6[%c0_20, %c0_21], %40 {strides = array<i32>} : memref<128x16xbf16, #tpu.memory_space<vmem>>, vector<128x16xbf16>,
      %42 = vector.extract_strided_slice %35 {offsets = [0, 32], sizes = [128, 16], strides = [1, 1]} : vector<128x48xf32> to vector<128x16xf32>
      %43 = arith.truncf %42 : vector<128x16xf32> to vector<128x16xbf16>
      %c0_22 = arith.constant 0 : index
      %c0_23 = arith.constant 0 : index
      %44 = vector.load %arg7[%c0_22, %c0_23] : memref<128x16xbf16, #tpu.memory_space<vmem>>, vector<128x16xbf16>
      tpu.vector_store %arg7[%c0_22, %c0_23], %43 {strides = array<i32>} : memref<128x16xbf16, #tpu.memory_space<vmem>>, vector<128x16xbf16>,
    } else {
    }
    %c64_i32 = arith.constant 64 : i32
    %3 = arith.muli %arg1, %c64_i32 : i32
    %4 = tpu.assume_multiple %3, 64 : i32
    %5 = arith.index_cast %4 : i32 to index
    %c0 = arith.constant 0 : index
    %6 = vector.load %arg5[%5, %c0] : memref<128x16xbf16, #tpu.memory_space<vmem>>, vector<64x16xbf16>
    %c0_1 = arith.constant 0 : index
    %c0_2 = arith.constant 0 : index
    %7 = vector.load %arg6[%c0_1, %c0_2] : memref<128x16xbf16, #tpu.memory_space<vmem>>, vector<128x16xbf16>
    %cst = arith.constant dense<0.000000e+00> : vector<64x128xf32>
    %8 = tpu.matmul %6, %7, %cst {dimension_numbers = #tpu.dot_dimension_numbers<[1], [1], [0], [0], [0, 0, 1, 0], [], []>} : vector<64x16xbf16>, vector<128x16xbf16>, vector<64x128xf32> -> vector<64x128xf32>
    %9 = tpu.iota {dimensions = array<i32: 0>} : vector<64x128xi32>
    %10 = vector.broadcast %4 : i32 to vector<64x128xi32>
    %11 = arith.addi %10, %9 : vector<64x128xi32>
    %12 = tpu.iota {dimensions = array<i32: 1>} : vector<64x128xi32>
    %13 = arith.cmpi sge, %11, %12 : vector<64x128xi32>
    %cst_3 = arith.constant -1.000000e+30 : f32
    %14 = vector.broadcast %cst_3 : f32 to vector<64x128xf32>
    %15 = arith.select %13, %8, %14 : vector<64x128xi1>, vector<64x128xf32>
    %cst_4 = arith.constant dense<0xFF800000> : vector<64xf32>
    %16 = vector.multi_reduction <maximumf>, %15, %cst_4 [1] : vector<64x128xf32> to vector<64xf32>
    %17 = vector.shape_cast %16 : vector<64xf32> to vector<64x1xf32>
    %18 = vector.broadcast %17 : vector<64x1xf32> to vector<64x128xf32>
    %19 = arith.subf %15, %18 : vector<64x128xf32>
    %20 = math.exp %19 : vector<64x128xf32>
    %cst_5 = arith.constant dense<0.000000e+00> : vector<64xf32>
    %21 = vector.multi_reduction <add>, %20, %cst_5 [1] : vector<64x128xf32> to vector<64xf32>
    %22 = vector.shape_cast %21 : vector<64xf32> to vector<64x1xf32>
    %23 = arith.truncf %20 : vector<64x128xf32> to vector<64x128xbf16>
    %c0_6 = arith.constant 0 : index
    %c0_7 = arith.constant 0 : index
    %24 = vector.load %arg7[%c0_6, %c0_7] : memref<128x16xbf16, #tpu.memory_space<vmem>>, vector<128x16xbf16>
    %cst_8 = arith.constant dense<0.000000e+00> : vector<64x16xf32>
    %25 = tpu.matmul %23, %24, %cst_8 {dimension_numbers = #tpu.dot_dimension_numbers<[1], [0], [0], [1], [0, 0, 1, 1], [], []>} : vector<64x128xbf16>, vector<128x16xbf16>, vector<64x16xf32> -> vector<64x16xf32>
    %26 = tpu.reciprocal %22 {approx = true} : vector<64x1xf32> -> vector<64x1xf32>
    %27 = vector.broadcast %26 : vector<64x1xf32> to vector<64x16xf32>
    %28 = arith.mulf %25, %27 : vector<64x16xf32>
    %c0_9 = arith.constant 0 : index
    %c0_10 = arith.constant 0 : index
    %c0_11 = arith.constant 0 : index
    %29 = vector.load %arg4[%c0_9, %c0_10, %c0_11] : memref<1x64x16xf32, #tpu.memory_space<vmem>>, vector<1x64x16xf32>
    %30 = vector.shape_cast %29 : vector<1x64x16xf32> to vector<64x16xf32>
    %31 = vector.shape_cast %28 : vector<64x16xf32> to vector<1x64x16xf32>
    tpu.vector_store %arg4[%c0_9, %c0_10, %c0_11], %31 {strides = array<i32>} : memref<1x64x16xf32, #tpu.memory_space<vmem>>, vector<1x64x16xf32>,
    return
  }
  func.func @transform_0(%arg0: i32, %arg1: i32) -> (i32, i32, i32) {
    %c0_i32 = arith.constant 0 : i32
    %c0_i32_0 = arith.constant 0 : i32
    %c0_i32_1 = arith.constant 0 : i32
    return %arg0, %c0_i32, %c0_i32_0 : i32, i32, i32
  }
  func.func @transform_1(%arg0: i32, %arg1: i32) -> (i32, i32) {
    %c0_i32 = arith.constant 0 : i32
    %c0_i32_0 = arith.constant 0 : i32
    %c0_i32_1 = arith.constant 0 : i32
    return %c0_i32, %c0_i32_0 : i32, i32
  }
  func.func @transform_2(%arg0: i32, %arg1: i32) -> (i32, i32, i32) {
    %c0_i32 = arith.constant 0 : i32
    %c0_i32_0 = arith.constant 0 : i32
    return %arg0, %arg1, %c0_i32 : i32, i32, i32
  }
}

</mosaic_0001>

<llo_original>
// kernel: tpu_custom_call.1
$region0: #{tpu_custom_call.1}
  #allocation0 [shape = 'u32[]', space=smem, size = 0x4, offset = 0x4, fixed_abs, tag = 'smem constant byte address 0x4 - core index']
  #allocation1 [shape = 'u32[144,128]{1,0:T(1,128)}', space=vmem, size = 0x12000, scoped, tag = 'internal scratch']
  #allocation2 [shape = 'bf16[128,16]{1,0:T(16,128)(2,1)}', space=vmem, size = 0x8000, scoped, tag = 'scratch operand']
  #allocation3 [shape = 'bf16[128,16]{1,0:T(16,128)(2,1)}', space=vmem, size = 0x8000, scoped, tag = 'scratch operand']
  #allocation4 [shape = 'bf16[128,16]{1,0:T(16,128)(2,1)}', space=vmem, size = 0x8000, scoped, tag = 'scratch operand']
  %s0 = inlined_call_operand.vmem [shape: bf16[2,128,64], index: 0, kind: input, shape index: {}]
  %s1 = inlined_call_operand.vmem [shape: bf16[64,48], index: 1, kind: input, shape index: {}]
  %s2 = inlined_call_operand.vmem [shape: f32[2,128,16], index: 2, kind: output, shape index: {}]
  %s3 = sld [smem:[#allocation0]]
  $region45: #{tpu_custom_call.1} parent=0
    _
  %s5 = ssub.s32 1, %s3
  %s6 = scalar_select 0, %s5, %s3
  loop: start=0, step=1, limit=6
  $region2: #{tpu_custom_call.1} parent=0 // loop_pre_header
    _
  $region3: #{tpu_custom_call.1} parent=0 // loop_header
    %s8 = sphi 0, %s12
    %p9 = scmp.ge.s32.totalorder %s8, 6
    %s15 = sphi 0, %s27
    %s16 = sphi 0, %s23
    %s17 = sphi 0, %s15
    %s18 = sphi 0, %s16
    %s19 = sphi 0, %s17
    %s20 = sphi 0, %s18
    %s30 = sphi 0, %s32
    %s33 = sphi 0, %s30
    %s34 = sphi 0, %s33
    %s50 = sphi 0, %s34
    %s54 = sphi 0, %s54
    %s56 = sphi 0, %s54
    %s57 = sphi 0, %s56
    %s71 = sphi 0, %s57
    %s79 = sphi 0, %s81
    %s82 = sphi 0, %s79
    %s83 = sphi 0, %s82
    %s99 = sphi 0, %s83
  $region4: #{tpu_custom_call.1} parent=0 // loop_header_branch
    %11 = sbr.rel (%p9) target = $region8
  $region5: #{tpu_custom_call.1} parent=0 // loop_body
    %s13 = ssub.s32 %s8, 1
    %s14 = ssub.s32 %s8, 2
    %s21 = sadd.s32 1, %s16
    %p22 = scmp.ge.s32.totalorder %s21, 2
    %s23 = scalar_select %p22, 0, %s21
    %s24 = sadd.s32 1, %s15
    %s25 = scalar_select %p22, %s24, %s15
    %p26 = scmp.ge.s32.totalorder %s25, 2
    %s27 = scalar_select %p26, 0, %s25
    %s28 = ssub.s32 %s15, %s27
    %p29 = scmp.eq.s32.totalorder %s28, 0
    %s31 = sadd.s32 %s30, 1
    %s32 = scalar_select %p29, %s30, %s31
    %p35 = pneg %p29
    %p36 = scmp.eq.s32.totalorder %s8, 3
    %p37 = por %p35, %p36
    %p38 = scmp.ne.s32.totalorder %s30, %s33
    %p39 = scmp.eq.s32.totalorder %s8, 0
    %p40 = por %p38, %p39
    %p41 = scmp.ne.s32.totalorder %s30, %s33
    %p42 = scmp.eq.s32.totalorder %s13, 3
    %p43 = por %p41, %p42
    %p44 = scmp.ne.s32.totalorder %s33, %s34
    %p45 = scmp.eq.s32.totalorder %s13, 0
    %p46 = por %p44, %p45
    %p47 = scmp.ne.s32.totalorder %s33, %s34
    %p48 = scmp.eq.s32.totalorder %s14, 3
    %p49 = por %p47, %p48
    %p51 = scmp.ne.s32.totalorder %s34, %s50
    %p52 = scmp.eq.s32.totalorder %s14, 0
    %p53 = por %p51, %p52
    %s55 = sadd.s32 %s54, 1
    %p58 = scmp.eq.s32.totalorder %s8, 3
    %p59 = scmp.ne.s32.totalorder %s54, %s56
    %p60 = scmp.eq.s32.totalorder %s8, 0
    %p61 = por %p59, %p60
    %p62 = scmp.ne.s32.totalorder %s54, %s56
    %p63 = scmp.eq.s32.totalorder %s13, 3
    %p64 = por %p62, %p63
    %p65 = scmp.ne.s32.totalorder %s56, %s57
    %p66 = scmp.eq.s32.totalorder %s13, 0
    %p67 = por %p65, %p66
    %p68 = scmp.ne.s32.totalorder %s56, %s57
    %p69 = scmp.eq.s32.totalorder %s14, 3
    %p70 = por %p68, %p69
    %p72 = scmp.ne.s32.totalorder %s57, %s71
    %p73 = scmp.eq.s32.totalorder %s14, 0
    %p74 = por %p72, %p73
    %s75 = ssub.s32 %s15, %s27
    %s76 = ssub.s32 %s16, %s23
    %s77 = sor.u32 %s75, %s76
    %p78 = scmp.eq.s32.totalorder %s77, 0
    %s80 = sadd.s32 %s79, 1
    %s81 = scalar_select %p78, %s79, %s80
    %p84 = pneg %p78
    %p85 = scmp.eq.s32.totalorder %s8, 3
    %p86 = por %p84, %p85
    %p87 = scmp.ne.s32.totalorder %s79, %s82
    %p88 = scmp.eq.s32.totalorder %s8, 0
    %p89 = por %p87, %p88
    %p90 = scmp.ne.s32.totalorder %s79, %s82
    %p91 = scmp.eq.s32.totalorder %s13, 3
    %p92 = por %p90, %p91
    %p93 = scmp.ne.s32.totalorder %s82, %s83
    %p94 = scmp.eq.s32.totalorder %s13, 0
    %p95 = por %p93, %p94
    %p96 = scmp.ne.s32.totalorder %s82, %s83
    %p97 = scmp.eq.s32.totalorder %s14, 3
    %p98 = por %p96, %p97
    %p100 = scmp.ne.s32.totalorder %s83, %s99
    %p101 = scmp.eq.s32.totalorder %s14, 0
    %p102 = por %p100, %p101
    %p103 = scmp.le.s32.totalorder 1, %s8
    %p104 = scmp.lt.s32.totalorder %s8, 5
    %p105 = pnand %p103, %p104
    %p106 = pneg %p105
    // Predicated region
    $region9: #{tpu_custom_call.1} parent=5 // pred_check
      _
    $region10: #{tpu_custom_call.1} parent=5 // pred_check_branch
      %108 = sbr.rel (%p105) target = $region12
    $region11: #{tpu_custom_call.1} parent=5 // pred_region
      %s109 = ssub.s32 %s8, 1
      // Predicated region
      $region13: #{tpu_custom_call.1} parent=11 // pred_check
        %p110 = pneg %p67
      $region14: #{tpu_custom_call.1} parent=11 // pred_check_branch
        %112 = sbr.rel (%p110) target = $region16
      $region15: #{tpu_custom_call.1} parent=11 // pred_region
        _
      $region16: #{tpu_custom_call.1} parent=11 // pred_fallthru
        _
    $region12: #{tpu_custom_call.1} parent=5 // pred_fallthru
      _
    %p113 = scmp.lt.s32.totalorder %s8, 4
    // Predicated region
    $region17: #{tpu_custom_call.1} parent=5 // pred_check
      %p114 = pneg %p113
    $region18: #{tpu_custom_call.1} parent=5 // pred_check_branch
      %116 = sbr.rel (%p114) target = $region20
    $region19: #{tpu_custom_call.1} parent=5 // pred_region
      // Predicated region
      $region21: #{tpu_custom_call.1} parent=19 // pred_check
        %p117 = pneg %p40
      $region22: #{tpu_custom_call.1} parent=19 // pred_check_branch
        %119 = sbr.rel (%p117) target = $region24
      $region23: #{tpu_custom_call.1} parent=19 // pred_region
        %p120 = scmp.lt.s32.totalorder %s15, 1
        %s121 = scalar_select %p120, %s15, 1
        %s122 = smul.addr %s121, 16
        %s123 = smul.addr %s122, 4
        %s124 = scalar_lea.vmem %s0, %s123
      $region24: #{tpu_custom_call.1} parent=19 // pred_fallthru
        _
    $region20: #{tpu_custom_call.1} parent=5 // pred_fallthru
      _
    %p125 = scmp.le.s32.totalorder 1, %s8
    %p126 = scmp.lt.s32.totalorder %s8, 5
    %p127 = pnand %p125, %p126
    %p128 = pneg %p127
    // Predicated region
    $region25: #{tpu_custom_call.1} parent=5 // pred_check
      _
    $region26: #{tpu_custom_call.1} parent=5 // pred_check_branch
      %130 = sbr.rel (%p127) target = $region28
    $region27: #{tpu_custom_call.1} parent=5 // pred_region
      %s131 = ssub.s32 %s8, 1
      %p132 = scmp.lt.s32.totalorder %s17, 1
      %s133 = scalar_select %p132, %s17, 1
      %s134 = smul.addr %s133, 16
      %s135 = smul.addr %s134, 4
      %s136 = scalar_lea.vmem %s0, %s135
      %p137 = pneg %p46
      %p138 = pneg %p43
      %p139 = pneg %p67
      %p140 = pneg %p64
      %p141 = pneg %p95
      %p142 = pneg %p92
      %s143 = smul.u32 8, %s18
      %p144 = scmp.lt.s32.totalorder %s17, 1
      %s145 = scalar_select %p144, %s17, 1
      %p146 = scmp.lt.s32.totalorder %s143, 15
      %s147 = scalar_select %p146, %s143, 15
      %s148 = smul.addr %s145, 16
      %s149 = sadd.s32 %s147, %s148
      %s150 = smul.addr %s149, 8
      %s151 = scalar_lea.vmem %s2, %s150
      %p152 = scmp.lt.s32.totalorder %s17, 1
      %s153 = scalar_select %p152, %s17, 1
      %s154 = smul.addr %s153, 16
      %s155 = smul.addr %s154, 4
      %s156 = scalar_lea.vmem %s0, %s155
      %s157 = smul.u32 8, %s18
      %p158 = scmp.lt.s32.totalorder %s17, 1
      %s159 = scalar_select %p158, %s17, 1
      %p160 = scmp.lt.s32.totalorder %s157, 15
      %s161 = scalar_select %p160, %s157, 15
      %s162 = smul.addr %s159, 16
      %s163 = sadd.s32 %s161, %s162
      %s164 = smul.addr %s163, 8
      %s165 = scalar_lea.vmem %s2, %s164
      %s166 = smul.u32 8, %s18
      %p168 = scmp.eq.s32.totalorder %s18, 0
      // Predicated region
      $region29: #{tpu_custom_call.1} parent=27 // pred_check
        %p169 = pneg %p168
      $region30: #{tpu_custom_call.1} parent=27 // pred_check_branch
        %171 = sbr.rel (%p169) target = $region32
      $region31: #{tpu_custom_call.1} parent=27 // pred_region
        %v172 = vld [vmem:[%s156] sm:$0xf]
        %v173 = vld [vmem:[%s156 + $0x4] sm:$0xf]
        %v174 = vld [vmem:[%s156 + $0x8] sm:$0xf]
        %v175 = vld [vmem:[%s156 + $0xc] sm:$0xf]
        %v176 = vld [vmem:[%s156 + $0x10] sm:$0xf]
        %v177 = vld [vmem:[%s156 + $0x14] sm:$0xf]
        %v178 = vld [vmem:[%s156 + $0x18] sm:$0xf]
        %v179 = vld [vmem:[%s156 + $0x1c] sm:$0xf]
        %v180 = vld [vmem:[%s156 + $0x20] sm:$0xf]
        %v181 = vld [vmem:[%s156 + $0x24] sm:$0xf]
        %v182 = vld [vmem:[%s156 + $0x28] sm:$0xf]
        %v183 = vld [vmem:[%s156 + $0x2c] sm:$0xf]
        %v184 = vld [vmem:[%s156 + $0x30] sm:$0xf]
        %v185 = vld [vmem:[%s156 + $0x34] sm:$0xf]
        %v186 = vld [vmem:[%s156 + $0x38] sm:$0xf]
        %v187 = vld [vmem:[%s156 + $0x3c] sm:$0xf]
        %v188 = vld [vmem:[%s1] sm:$0xf]
        %v189 = vld [vmem:[%s1 + $0x4] sm:$0xf]
        %v190 = vld [vmem:[%s1 + $0x8] sm:$0xf]
        %v191 = vld [vmem:[%s1 + $0xc] sm:$0xf]
        %v192 = vld [vmem:[%s1 + $0x10] sm:$0xf]
        %v193 = vld [vmem:[%s1 + $0x14] sm:$0xf]
        %v194 = vld [vmem:[%s1 + $0x18] sm:$0xf]
        %v195 = vld [vmem:[%s1 + $0x1c] sm:$0xf]
        %v212 = vunpack.c.l.b16 %v172
        %v213 = vunpack.c.l.b16 %v173
        %v214 = vunpack.c.l.b16 %v174
        %v215 = vunpack.c.l.b16 %v175
        %v216 = vunpack.c.l.b16 %v176
        %v217 = vunpack.c.l.b16 %v177
        %v218 = vunpack.c.l.b16 %v178
        %v219 = vunpack.c.l.b16 %v179
        %v220 = vunpack.c.l.b16 %v180
        %v221 = vunpack.c.l.b16 %v181
        %v222 = vunpack.c.l.b16 %v182
        %v223 = vunpack.c.l.b16 %v183
        %v224 = vunpack.c.l.b16 %v184
        %v225 = vunpack.c.l.b16 %v185
        %v226 = vunpack.c.l.b16 %v186
        %v227 = vunpack.c.l.b16 %v187
        %v228 = vpack.c.b16 %v213, %v212
        %v229 = vpack.c.b16 %v215, %v214
        %v230 = vpack.c.b16 %v217, %v216
        %v231 = vpack.c.b16 %v219, %v218
        %v232 = vpack.c.b16 %v221, %v220
        %v233 = vpack.c.b16 %v223, %v222
        %v234 = vpack.c.b16 %v225, %v224
        %v235 = vpack.c.b16 %v227, %v226
        %v244 = vunpack.c.l.b16 %v188
        %v245 = vunpack.c.l.b16 %v189
        %v246 = vunpack.c.l.b16 %v190
        %v247 = vunpack.c.l.b16 %v191
        %v248 = vunpack.c.l.b16 %v192
        %v249 = vunpack.c.l.b16 %v193
        %v250 = vunpack.c.l.b16 %v194
        %v251 = vunpack.c.l.b16 %v195
        %v252 = vpack.c.b16 %v245, %v244
        %v253 = vpack.c.b16 %v247, %v246
        %v254 = vpack.c.b16 %v249, %v248
        %v255 = vpack.c.b16 %v251, %v250
        %vm260 = vcmask 523264
        %v262 = vsel %vm260, %v228, 0
        %v265 = vsel %vm260, %v229, 0
        %v268 = vsel %vm260, %v230, 0
        %v271 = vsel %vm260, %v231, 0
        %v274 = vsel %vm260, %v232, 0
        %v277 = vsel %vm260, %v233, 0
        %v280 = vsel %vm260, %v234, 0
        %v283 = vsel %vm260, %v235, 0
        %285 = vmatprep.subr.bf16.mxu0 0
        %286 = vmatpush1.bf16.msra.mxu0 %v252
        %287 = vmatprep.subr.bf16.mxu0 0
        %288 = vmatpush1.bf16.msra.mxu0 %v253
        %289 = vmatprep.subr.bf16.mxu0 0
        %290 = vmatpush1.bf16.msra.mxu0 %v254
        %291 = vmatprep.subr.bf16.mxu0 0
        %292 = vmatpush1.bf16.msra.mxu0 %v255
        %293 = vmatprep.subr.bf16.mxu0 0
        %294 = vmatpush1.bf16.msra.mxu0 0
        %295 = vmatprep.subr.bf16.mxu0 0
        %296 = vmatpush1.bf16.msra.mxu0 0
        %297 = vmatprep.subr.bf16.mxu0 0
        %298 = vmatpush1.bf16.msra.mxu0 0
        %299 = vmatprep.subr.bf16.mxu0 0
        %300 = vmatpush1.bf16.msra.mxu0 0
        %301 = vmatprep.subr.bf16.mxu0 0
        %302 = vmatpush1.bf16.msra.mxu0 0
        %303 = vmatprep.subr.bf16.mxu0 0
        %304 = vmatpush1.bf16.msra.mxu0 0
        %305 = vmatprep.subr.bf16.mxu0 0
        %306 = vmatpush1.bf16.msra.mxu0 0
        %307 = vmatprep.subr.bf16.mxu0 0
        %308 = vmatpush1.bf16.msra.mxu0 0
        %309 = vmatprep.subr.bf16.mxu0 0
        %310 = vmatpush1.bf16.msra.mxu0 0
        %311 = vmatprep.subr.bf16.mxu0 0
        %312 = vmatpush1.bf16.msra.mxu0 0
        %313 = vmatprep.subr.bf16.mxu0 0
        %314 = vmatpush1.bf16.msra.mxu0 0
        %315 = vmatprep.subr.bf16.mxu0 0
        %316 = vmatpush1.bf16.msra.mxu0 0
        %317 = vmatprep.mubr.bf16.mxu0 0
        %318 = vmatmul.mubr.bf16.gmra.mrb[0].mxu0 %v262
        %v319 = vpop.f32.mrb[0].mxu0
        %v320 = vadd.f32 0.0, %v319
        %v321 = vpop.f32.mrb[0].mxu0
        %v322 = vpop.f32.mrb[0].mxu0
        %v323 = vadd.f32 0.0, %v322
        %v324 = vpop.f32.mrb[0].mxu0
        %325 = vmatprep.mubr.bf16.mxu0 0
        %326 = vmatmul.mubr.bf16.gmra.mrb[0].mxu0 %v265
        %v327 = vpop.f32.mrb[0].mxu0
        %v328 = vadd.f32 0.0, %v327
        %v329 = vpop.f32.mrb[0].mxu0
        %v330 = vpop.f32.mrb[0].mxu0
        %v331 = vadd.f32 0.0, %v330
        %v332 = vpop.f32.mrb[0].mxu0
        %333 = vmatprep.mubr.bf16.mxu0 0
        %334 = vmatmul.mubr.bf16.gmra.mrb[0].mxu0 %v268
        %v335 = vpop.f32.mrb[0].mxu0
        %v336 = vadd.f32 0.0, %v335
        %v337 = vpop.f32.mrb[0].mxu0
        %v338 = vpop.f32.mrb[0].mxu0
        %v339 = vadd.f32 0.0, %v338
        %v340 = vpop.f32.mrb[0].mxu0
        %341 = vmatprep.mubr.bf16.mxu0 0
        %342 = vmatmul.mubr.bf16.gmra.mrb[0].mxu0 %v271
        %v343 = vpop.f32.mrb[0].mxu0
        %v344 = vadd.f32 0.0, %v343
        %v345 = vpop.f32.mrb[0].mxu0
        %v346 = vpop.f32.mrb[0].mxu0
        %v347 = vadd.f32 0.0, %v346
        %v348 = vpop.f32.mrb[0].mxu0
        %349 = vmatprep.mubr.bf16.mxu0 0
        %350 = vmatmul.mubr.bf16.gmra.mrb[0].mxu0 %v274
        %v351 = vpop.f32.mrb[0].mxu0
        %v352 = vadd.f32 0.0, %v351
        %v353 = vpop.f32.mrb[0].mxu0
        %v354 = vpop.f32.mrb[0].mxu0
        %v355 = vadd.f32 0.0, %v354
        %v356 = vpop.f32.mrb[0].mxu0
        %357 = vmatprep.mubr.bf16.mxu0 0
        %358 = vmatmul.mubr.bf16.gmra.mrb[0].mxu0 %v277
        %v359 = vpop.f32.mrb[0].mxu0
        %v360 = vadd.f32 0.0, %v359
        %v361 = vpop.f32.mrb[0].mxu0
        %v362 = vpop.f32.mrb[0].mxu0
        %v363 = vadd.f32 0.0, %v362
        %v364 = vpop.f32.mrb[0].mxu0
        %365 = vmatprep.mubr.bf16.mxu0 0
        %366 = vmatmul.mubr.bf16.gmra.mrb[0].mxu0 %v280
        %v367 = vpop.f32.mrb[0].mxu0
        %v368 = vadd.f32 0.0, %v367
        %v369 = vpop.f32.mrb[0].mxu0
        %v370 = vpop.f32.mrb[0].mxu0
        %v371 = vadd.f32 0.0, %v370
        %v372 = vpop.f32.mrb[0].mxu0
        %373 = vmatprep.mubr.bf16.mxu0 0
        %374 = vmatmul.mubr.bf16.gmra.mrb[0].mxu0 %v283
        %v375 = vpop.f32.mrb[0].mxu0
        %v376 = vadd.f32 0.0, %v375
        %v377 = vpop.f32.mrb[0].mxu0
        %v378 = vpop.f32.mrb[0].mxu0
        %v379 = vadd.f32 0.0, %v378
        %v380 = vpop.f32.mrb[0].mxu0
        %381 = vdwg.mxu0
        %v382 = vpack.c.bf16 %v323, %v320
        %v383 = vpack.c.bf16 %v331, %v328
        %v384 = vpack.c.bf16 %v339, %v336
        %v385 = vpack.c.bf16 %v347, %v344
        %v386 = vpack.c.bf16 %v355, %v352
        %v387 = vpack.c.bf16 %v363, %v360
        %v388 = vpack.c.bf16 %v371, %v368
        %v389 = vpack.c.bf16 %v379, %v376
        %vm390 = vcmask 130048
        %391 = vst.msk [vmem:[#allocation2] sm:$0xff] %vm390, %v382
        %392 = vst.msk [vmem:[#allocation2 + $0x8] sm:$0xff] %vm390, %v383
        %393 = vst.msk [vmem:[#allocation2 + $0x10] sm:$0xff] %vm390, %v384
        %394 = vst.msk [vmem:[#allocation2 + $0x18] sm:$0xff] %vm390, %v385
        %395 = vst.msk [vmem:[#allocation2 + $0x20] sm:$0xff] %vm390, %v386
        %396 = vst.msk [vmem:[#allocation2 + $0x28] sm:$0xff] %vm390, %v387
        %397 = vst.msk [vmem:[#allocation2 + $0x30] sm:$0xff] %vm390, %v388
        %398 = vst.msk [vmem:[#allocation2 + $0x38] sm:$0xff] %vm390, %v389
        %407 = vrot.lane.b32.xlu0 %v382, 112
        %v408 = vpop.permute.xlu0 %407
        %409 = vrot.lane.b32.xlu0 %v383, 112
        %v410 = vpop.permute.xlu0 %409
        %411 = vrot.lane.b32.xlu0 %v384, 112
        %v412 = vpop.permute.xlu0 %411
        %413 = vrot.lane.b32.xlu0 %v385, 112
        %v414 = vpop.permute.xlu0 %413
        %415 = vrot.lane.b32.xlu0 %v386, 112
        %v416 = vpop.permute.xlu0 %415
        %417 = vrot.lane.b32.xlu0 %v387, 112
        %v418 = vpop.permute.xlu0 %417
        %419 = vrot.lane.b32.xlu0 %v388, 112
        %v420 = vpop.permute.xlu0 %419
        %421 = vrot.lane.b32.xlu0 %v389, 112
        %v422 = vpop.permute.xlu0 %421
        %431 = vst.msk [vmem:[#allocation3] sm:$0xff] %vm390, %v408
        %432 = vst.msk [vmem:[#allocation3 + $0x8] sm:$0xff] %vm390, %v410
        %433 = vst.msk [vmem:[#allocation3 + $0x10] sm:$0xff] %vm390, %v412
        %434 = vst.msk [vmem:[#allocation3 + $0x18] sm:$0xff] %vm390, %v414
        %435 = vst.msk [vmem:[#allocation3 + $0x20] sm:$0xff] %vm390, %v416
        %436 = vst.msk [vmem:[#allocation3 + $0x28] sm:$0xff] %vm390, %v418
        %437 = vst.msk [vmem:[#allocation3 + $0x30] sm:$0xff] %vm390, %v420
        %438 = vst.msk [vmem:[#allocation3 + $0x38] sm:$0xff] %vm390, %v422
        %439 = vrot.lane.b32.xlu0 %v382, 96
        %v440 = vpop.permute.xlu0 %439
        %441 = vrot.lane.b32.xlu0 %v383, 96
        %v442 = vpop.permute.xlu0 %441
        %443 = vrot.lane.b32.xlu0 %v384, 96
        %v444 = vpop.permute.xlu0 %443
        %445 = vrot.lane.b32.xlu0 %v385, 96
        %v446 = vpop.permute.xlu0 %445
        %447 = vrot.lane.b32.xlu0 %v386, 96
        %v448 = vpop.permute.xlu0 %447
        %449 = vrot.lane.b32.xlu0 %v387, 96
        %v450 = vpop.permute.xlu0 %449
        %451 = vrot.lane.b32.xlu0 %v388, 96
        %v452 = vpop.permute.xlu0 %451
        %453 = vrot.lane.b32.xlu0 %v389, 96
        %v454 = vpop.permute.xlu0 %453
        %463 = vst.msk [vmem:[#allocation4] sm:$0xff] %vm390, %v440
        %464 = vst.msk [vmem:[#allocation4 + $0x8] sm:$0xff] %vm390, %v442
        %465 = vst.msk [vmem:[#allocation4 + $0x10] sm:$0xff] %vm390, %v444
        %466 = vst.msk [vmem:[#allocation4 + $0x18] sm:$0xff] %vm390, %v446
        %467 = vst.msk [vmem:[#allocation4 + $0x20] sm:$0xff] %vm390, %v448
        %468 = vst.msk [vmem:[#allocation4 + $0x28] sm:$0xff] %vm390, %v450
        %469 = vst.msk [vmem:[#allocation4 + $0x30] sm:$0xff] %vm390, %v452
        %470 = vst.msk [vmem:[#allocation4 + $0x38] sm:$0xff] %vm390, %v454
      $region32: #{tpu_custom_call.1} parent=27 // pred_fallthru
        _
      %s471 = smul.u32 %s18, 64
      %s472 = sshra.s32 %s471, 4
      %s473 = sand.u32 %s471, 15
      %s474 = smul.addr %s472, 8
      %s475 = scalar_lea.vmem [#allocation2], %s474
      %v476 = vld [vmem:[%s475] sm:$0xff]
      %v477 = vld [vmem:[%s475 + $0x8] sm:$0xff]
      %v478 = vld [vmem:[%s475 + $0x10] sm:$0xff]
      %v479 = vld [vmem:[%s475 + $0x18] sm:$0xff]
      %v480 = vld [vmem:[#allocation3] sm:$0xff]
      %v481 = vld [vmem:[#allocation3 + $0x8] sm:$0xff]
      %v482 = vld [vmem:[#allocation3 + $0x10] sm:$0xff]
      %v483 = vld [vmem:[#allocation3 + $0x18] sm:$0xff]
      %v484 = vld [vmem:[#allocation3 + $0x20] sm:$0xff]
      %v485 = vld [vmem:[#allocation3 + $0x28] sm:$0xff]
      %v486 = vld [vmem:[#allocation3 + $0x30] sm:$0xff]
      %v487 = vld [vmem:[#allocation3 + $0x38] sm:$0xff]
      %vm488 = vcmask 130048
      %v490 = vsel %vm488, %v476, 0
      %v493 = vsel %vm488, %v477, 0
      %v496 = vsel %vm488, %v478, 0
      %v499 = vsel %vm488, %v479, 0
      %v502 = vsel %vm488, %v480, 0
      %v505 = vsel %vm488, %v481, 0
      %v508 = vsel %vm488, %v482, 0
      %v511 = vsel %vm488, %v483, 0
      %v514 = vsel %vm488, %v484, 0
      %v517 = vsel %vm488, %v485, 0
      %v520 = vsel %vm488, %v486, 0
      %v523 = vsel %vm488, %v487, 0
      %525 = vmatprep.subr.bf16.mxu0 0
      %526 = vmatpush1.bf16.xpose.msra.mxu0 %v502
      %527 = vmatprep.subr.bf16.mxu0 0
      %528 = vmatpush1.bf16.xpose.msra.mxu0 %v505
      %529 = vmatprep.subr.bf16.mxu0 0
      %530 = vmatpush1.bf16.xpose.msra.mxu0 %v508
      %531 = vmatprep.subr.bf16.mxu0 0
      %532 = vmatpush1.bf16.xpose.msra.mxu0 %v511
      %533 = vmatprep.subr.bf16.mxu0 0
      %534 = vmatpush1.bf16.xpose.msra.mxu0 %v514
      %535 = vmatprep.subr.bf16.mxu0 0
      %536 = vmatpush1.bf16.xpose.msra.mxu0 %v517
      %537 = vmatprep.subr.bf16.mxu0 0
      %538 = vmatpush1.bf16.xpose.msra.mxu0 %v520
      %539 = vmatprep.subr.bf16.mxu0 0
      %540 = vmatpush1.bf16.xpose.msra.mxu0 %v523
      %541 = vmatprep.subr.bf16.mxu0 0
      %542 = vmatpush1.bf16.xpose.msra.mxu0 0
      %543 = vmatprep.subr.bf16.mxu0 0
      %544 = vmatpush1.bf16.xpose.msra.mxu0 0
      %545 = vmatprep.subr.bf16.mxu0 0
      %546 = vmatpush1.bf16.xpose.msra.mxu0 0
      %547 = vmatprep.subr.bf16.mxu0 0
      %548 = vmatpush1.bf16.xpose.msra.mxu0 0
      %549 = vmatprep.subr.bf16.mxu0 0
      %550 = vmatpush1.bf16.xpose.msra.mxu0 0
      %551 = vmatprep.subr.bf16.mxu0 0
      %552 = vmatpush1.bf16.xpose.msra.mxu0 0
      %553 = vmatprep.subr.bf16.mxu0 0
      %554 = vmatpush1.bf16.xpose.msra.mxu0 0
      %555 = vmatprep.subr.bf16.mxu0 0
      %556 = vmatpush1.bf16.xpose.msra.mxu0 0
      %557 = vmatprep.mubr.bf16.mxu0 0
      %558 = vmatmul.mubr.bf16.gmra.mrb[0].mxu0 %v490
      %v559 = vpop.f32.mrb[0].mxu0
      %v560 = vadd.f32 0.0, %v559
      %v561 = vpop.f32.mrb[0].mxu0
      %v562 = vpop.f32.mrb[0].mxu0
      %v563 = vadd.f32 0.0, %v562
      %v564 = vpop.f32.mrb[0].mxu0
      %565 = vmatprep.mubr.bf16.mxu0 0
      %566 = vmatmul.mubr.bf16.gmra.mrb[0].mxu0 %v493
      %v567 = vpop.f32.mrb[0].mxu0
      %v568 = vadd.f32 0.0, %v567
      %v569 = vpop.f32.mrb[0].mxu0
      %v570 = vpop.f32.mrb[0].mxu0
      %v571 = vadd.f32 0.0, %v570
      %v572 = vpop.f32.mrb[0].mxu0
      %573 = vmatprep.mubr.bf16.mxu0 0
      %574 = vmatmul.mubr.bf16.gmra.mrb[0].mxu0 %v496
      %v575 = vpop.f32.mrb[0].mxu0
      %v576 = vadd.f32 0.0, %v575
      %v577 = vpop.f32.mrb[0].mxu0
      %v578 = vpop.f32.mrb[0].mxu0
      %v579 = vadd.f32 0.0, %v578
      %v580 = vpop.f32.mrb[0].mxu0
      %581 = vmatprep.mubr.bf16.mxu0 0
      %582 = vmatmul.mubr.bf16.gmra.mrb[0].mxu0 %v499
      %v583 = vpop.f32.mrb[0].mxu0
      %v584 = vadd.f32 0.0, %v583
      %v585 = vpop.f32.mrb[0].mxu0
      %v586 = vpop.f32.mrb[0].mxu0
      %v587 = vadd.f32 0.0, %v586
      %v588 = vpop.f32.mrb[0].mxu0
      %589 = vdwg.mxu0
      %v590 = vlaneseq
      %v591 = vshrl.u32 %v590, 7
      %v592 = vadd.s32 %v591, 8
      %v593 = vadd.s32 %v591, 16
      %v594 = vadd.s32 %v591, 24
      %v595 = vadd.s32 %v591, 32
      %v596 = vadd.s32 %v591, 40
      %v597 = vadd.s32 %v591, 48
      %v598 = vadd.s32 %v591, 56
      %v599 = vstv %s471
      %v600 = vadd.s32 %v599, %v591
      %v601 = vadd.s32 %v599, %v592
      %v602 = vadd.s32 %v599, %v593
      %v603 = vadd.s32 %v599, %v594
      %v604 = vadd.s32 %v599, %v595
      %v605 = vadd.s32 %v599, %v596
      %v606 = vadd.s32 %v599, %v597
      %v607 = vadd.s32 %v599, %v598
      %v608 = vlaneseq
      %v609 = vand.u32 %v608, 127
      %vm610 = vcmp.ge.s32.totalorder %v600, %v609
      %vm611 = vcmp.ge.s32.totalorder %v601, %v609
      %vm612 = vcmp.ge.s32.totalorder %v602, %v609
      %vm613 = vcmp.ge.s32.totalorder %v603, %v609
      %vm614 = vcmp.ge.s32.totalorder %v604, %v609
      %vm615 = vcmp.ge.s32.totalorder %v605, %v609
      %vm616 = vcmp.ge.s32.totalorder %v606, %v609
      %vm617 = vcmp.ge.s32.totalorder %v607, %v609
      %v618 = vsel %vm610, %v560, -1e+30
      %v619 = vsel %vm611, %v563, -1e+30
      %v620 = vsel %vm612, %v568, -1e+30
      %v621 = vsel %vm613, %v571, -1e+30
      %v622 = vsel %vm614, %v576, -1e+30
      %v623 = vsel %vm615, %v579, -1e+30
      %v624 = vsel %vm616, %v584, -1e+30
      %v625 = vsel %vm617, %v587, -1e+30
      %626 = vmax.xlane.f32.xlu0 %v618
      %v627 = vpop.xlane.xlu0 %626
      %628 = vmax.xlane.f32.xlu0 %v619
      %v629 = vpop.xlane.xlu0 %628
      %630 = vmax.xlane.f32.xlu0 %v620
      %v631 = vpop.xlane.xlu0 %630
      %632 = vmax.xlane.f32.xlu0 %v621
      %v633 = vpop.xlane.xlu0 %632
      %634 = vmax.xlane.f32.xlu0 %v622
      %v635 = vpop.xlane.xlu0 %634
      %636 = vmax.xlane.f32.xlu0 %v623
      %v637 = vpop.xlane.xlu0 %636
      %638 = vmax.xlane.f32.xlu0 %v624
      %v639 = vpop.xlane.xlu0 %638
      %640 = vmax.xlane.f32.xlu0 %v625
      %v641 = vpop.xlane.xlu0 %640
      %v642 = vsub.f32 %v618, %v627
      %v643 = vsub.f32 %v619, %v629
      %v644 = vsub.f32 %v620, %v631
      %v645 = vsub.f32 %v621, %v633
      %v646 = vsub.f32 %v622, %v635
      %v647 = vsub.f32 %v623, %v637
      %v648 = vsub.f32 %v624, %v639
      %v649 = vsub.f32 %v625, %v641
      %v650 = vmul.f32 %v642, 1.442695
      %v651 = vpow.pop %v650
      %v652 = vmul.f32 %v643, 1.442695
      %v653 = vpow.pop %v652
      %v654 = vmul.f32 %v644, 1.442695
      %v655 = vpow.pop %v654
      %v656 = vmul.f32 %v645, 1.442695
      %v657 = vpow.pop %v656
      %v658 = vmul.f32 %v646, 1.442695
      %v659 = vpow.pop %v658
      %v660 = vmul.f32 %v647, 1.442695
      %v661 = vpow.pop %v660
      %v662 = vmul.f32 %v648, 1.442695
      %v663 = vpow.pop %v662
      %v664 = vmul.f32 %v649, 1.442695
      %v665 = vpow.pop %v664
      %666 = vadd.xlane.f32.xlu0 %v651
      %v667 = vpop.xlane.xlu0 %666
      %668 = vadd.xlane.f32.xlu0 %v653
      %v669 = vpop.xlane.xlu0 %668
      %670 = vadd.xlane.f32.xlu0 %v655
      %v671 = vpop.xlane.xlu0 %670
      %672 = vadd.xlane.f32.xlu0 %v657
      %v673 = vpop.xlane.xlu0 %672
      %674 = vadd.xlane.f32.xlu0 %v659
      %v675 = vpop.xlane.xlu0 %674
      %676 = vadd.xlane.f32.xlu0 %v661
      %v677 = vpop.xlane.xlu0 %676
      %678 = vadd.xlane.f32.xlu0 %v663
      %v679 = vpop.xlane.xlu0 %678
      %680 = vadd.xlane.f32.xlu0 %v665
      %v681 = vpop.xlane.xlu0 %680
      %v682 = vpack.c.bf16 %v653, %v651
      %v683 = vpack.c.bf16 %v657, %v655
      %v684 = vpack.c.bf16 %v661, %v659
      %v685 = vpack.c.bf16 %v665, %v663
      %v686 = vld [vmem:[#allocation4] sm:$0xff]
      %v687 = vld [vmem:[#allocation4 + $0x8] sm:$0xff]
      %v688 = vld [vmem:[#allocation4 + $0x10] sm:$0xff]
      %v689 = vld [vmem:[#allocation4 + $0x18] sm:$0xff]
      %v690 = vld [vmem:[#allocation4 + $0x20] sm:$0xff]
      %v691 = vld [vmem:[#allocation4 + $0x28] sm:$0xff]
      %v692 = vld [vmem:[#allocation4 + $0x30] sm:$0xff]
      %v693 = vld [vmem:[#allocation4 + $0x38] sm:$0xff]
      %694 = vmatprep.subr.bf16.mxu0 0
      %695 = vmatpush1.bf16.msra.mxu0 %v686
      %696 = vmatprep.subr.bf16.mxu0 0
      %697 = vmatpush1.bf16.msra.mxu0 %v687
      %698 = vmatprep.subr.bf16.mxu0 0
      %699 = vmatpush1.bf16.msra.mxu0 %v688
      %700 = vmatprep.subr.bf16.mxu0 0
      %701 = vmatpush1.bf16.msra.mxu0 %v689
      %702 = vmatprep.subr.bf16.mxu0 0
      %703 = vmatpush1.bf16.msra.mxu0 %v690
      %704 = vmatprep.subr.bf16.mxu0 0
      %705 = vmatpush1.bf16.msra.mxu0 %v691
      %706 = vmatprep.subr.bf16.mxu0 0
      %707 = vmatpush1.bf16.msra.mxu0 %v692
      %708 = vmatprep.subr.bf16.mxu0 0
      %709 = vmatpush1.bf16.msra.mxu0 %v693
      %710 = vmatprep.subr.bf16.mxu0 0
      %711 = vmatpush1.bf16.msra.mxu0 0
      %712 = vmatprep.subr.bf16.mxu0 0
      %713 = vmatpush1.bf16.msra.mxu0 0
      %714 = vmatprep.subr.bf16.mxu0 0
      %715 = vmatpush1.bf16.msra.mxu0 0
      %716 = vmatprep.subr.bf16.mxu0 0
      %717 = vmatpush1.bf16.msra.mxu0 0
      %718 = vmatprep.subr.bf16.mxu0 0
      %719 = vmatpush1.bf16.msra.mxu0 0
      %720 = vmatprep.subr.bf16.mxu0 0
      %721 = vmatpush1.bf16.msra.mxu0 0
      %722 = vmatprep.subr.bf16.mxu0 0
      %723 = vmatpush1.bf16.msra.mxu0 0
      %724 = vmatprep.subr.bf16.mxu0 0
      %725 = vmatpush1.bf16.msra.mxu0 0
      %726 = vmatprep.mubr.bf16.mxu0 0
      %727 = vmatmul.mubr.bf16.gmra.mrb[0].mxu0 %v682
      %v728 = vpop.f32.mrb[0].mxu0
      %v729 = vadd.f32 0.0, %v728
      %v730 = vpop.f32.mrb[0].mxu0
      %v731 = vpop.f32.mrb[0].mxu0
      %v732 = vadd.f32 0.0, %v731
      %v733 = vpop.f32.mrb[0].mxu0
      %734 = vmatprep.mubr.bf16.mxu0 0
      %735 = vmatmul.mubr.bf16.gmra.mrb[0].mxu0 %v683
      %v736 = vpop.f32.mrb[0].mxu0
      %v737 = vadd.f32 0.0, %v736
      %v738 = vpop.f32.mrb[0].mxu0
      %v739 = vpop.f32.mrb[0].mxu0
      %v740 = vadd.f32 0.0, %v739
      %v741 = vpop.f32.mrb[0].mxu0
      %742 = vmatprep.mubr.bf16.mxu0 0
      %743 = vmatmul.mubr.bf16.gmra.mrb[0].mxu0 %v684
      %v744 = vpop.f32.mrb[0].mxu0
      %v745 = vadd.f32 0.0, %v744
      %v746 = vpop.f32.mrb[0].mxu0
      %v747 = vpop.f32.mrb[0].mxu0
      %v748 = vadd.f32 0.0, %v747
      %v749 = vpop.f32.mrb[0].mxu0
      %750 = vmatprep.mubr.bf16.mxu0 0
      %751 = vmatmul.mubr.bf16.gmra.mrb[0].mxu0 %v685
      %v752 = vpop.f32.mrb[0].mxu0
      %v753 = vadd.f32 0.0, %v752
      %v754 = vpop.f32.mrb[0].mxu0
      %v755 = vpop.f32.mrb[0].mxu0
      %v756 = vadd.f32 0.0, %v755
      %v757 = vpop.f32.mrb[0].mxu0
      %758 = vdwg.mxu0
      %v759 = vrcp.pop %v667
      %v760 = vrcp.pop %v669
      %v761 = vrcp.pop %v671
      %v762 = vrcp.pop %v673
      %v763 = vrcp.pop %v675
      %v764 = vrcp.pop %v677
      %v765 = vrcp.pop %v679
      %v766 = vrcp.pop %v681
      %v767 = vmul.f32 %v729, %v759
      %v768 = vmul.f32 %v732, %v760
      %v769 = vmul.f32 %v737, %v761
      %v770 = vmul.f32 %v740, %v762
      %v771 = vmul.f32 %v745, %v763
      %v772 = vmul.f32 %v748, %v764
      %v773 = vmul.f32 %v753, %v765
      %v774 = vmul.f32 %v756, %v766
      %775 = vst.msk [vmem:[%s165] sm:$0xff] %vm488, %v767
      %776 = vst.msk [vmem:[%s165 + $0x8] sm:$0xff] %vm488, %v768
      %777 = vst.msk [vmem:[%s165 + $0x10] sm:$0xff] %vm488, %v769
      %778 = vst.msk [vmem:[%s165 + $0x18] sm:$0xff] %vm488, %v770
      %779 = vst.msk [vmem:[%s165 + $0x20] sm:$0xff] %vm488, %v771
      %780 = vst.msk [vmem:[%s165 + $0x28] sm:$0xff] %vm488, %v772
      %781 = vst.msk [vmem:[%s165 + $0x30] sm:$0xff] %vm488, %v773
      %782 = vst.msk [vmem:[%s165 + $0x38] sm:$0xff] %vm488, %v774
      %s783 = smul.u32 8, %s18
      %p784 = scmp.lt.s32.totalorder %s17, 1
      %s785 = scalar_select %p784, %s17, 1
      %p786 = scmp.lt.s32.totalorder %s783, 15
      %s787 = scalar_select %p786, %s783, 15
      %s788 = smul.addr %s785, 16
      %s789 = sadd.s32 %s787, %s788
      %s790 = smul.addr %s789, 8
      %s791 = scalar_lea.vmem %s2, %s790
      // Predicated region
      $region33: #{tpu_custom_call.1} parent=27 // pred_check
        %p792 = pneg %p92
      $region34: #{tpu_custom_call.1} parent=27 // pred_check_branch
        %794 = sbr.rel (%p792) target = $region36
      $region35: #{tpu_custom_call.1} parent=27 // pred_region
        %s795 = smul.u32 8, %s18
      $region36: #{tpu_custom_call.1} parent=27 // pred_fallthru
        _
    $region28: #{tpu_custom_call.1} parent=5 // pred_fallthru
      _
    %p796 = scmp.le.s32.totalorder 2, %s8
    // Predicated region
    $region37: #{tpu_custom_call.1} parent=5 // pred_check
      %p797 = pneg %p796
    $region38: #{tpu_custom_call.1} parent=5 // pred_check_branch
      %799 = sbr.rel (%p797) target = $region40
    $region39: #{tpu_custom_call.1} parent=5 // pred_region
      %s800 = ssub.s32 %s8, 2
      // Predicated region
      $region41: #{tpu_custom_call.1} parent=39 // pred_check
        %p801 = pneg %p98
      $region42: #{tpu_custom_call.1} parent=39 // pred_check_branch
        %803 = sbr.rel (%p801) target = $region44
      $region43: #{tpu_custom_call.1} parent=39 // pred_region
        %s804 = smul.u32 8, %s20
        %p805 = scmp.lt.s32.totalorder %s19, 1
        %s806 = scalar_select %p805, %s19, 1
        %p807 = scmp.lt.s32.totalorder %s804, 15
        %s808 = scalar_select %p807, %s804, 15
        %s809 = smul.addr %s806, 16
        %s810 = sadd.s32 %s808, %s809
        %s811 = smul.addr %s810, 8
        %s812 = scalar_lea.vmem %s2, %s811
      $region44: #{tpu_custom_call.1} parent=39 // pred_fallthru
        _
    $region40: #{tpu_custom_call.1} parent=5 // pred_fallthru
      _
  $region6: #{tpu_custom_call.1} parent=0 // loop_footer
    %s12 = sadd.s32 1, %s8
  $region7: #{tpu_custom_call.1} parent=0 // loop_footer_branch
    %7 = sbr.rel target = $region3
  $region8: #{tpu_custom_call.1} parent=0 // loop_exit
    _

</llo_original>
